<compile_context>
chip_gen: v6e
topology: v6e:2x2x1
jax: 0.10.0
libtpu: 0.0.40
codegen_flags: <defaults>
</compile_context>

<pallas_src>
import functools

import jax
import jax.numpy as jnp
from jax.experimental import pallas as pl
from jax.experimental.pallas import tpu as pltpu


def _i3d_head_kernel(x_ref, w_ref, b_ref, o_ref, acc_ref, *, s_total, inv_s,
                     max_unrolled_chunks=64):
    """Streaming global-average-pool + linear classifier (C-tiled).

    x_ref:   (TN, TC, S)   activations chunk; S (lane axis) is the full extent
    w_ref:   (TC, Kp)      fc weight chunk (transposed vs. torch, K padded)
    b_ref:   (1, Kp)       fc bias (K padded)
    o_ref:   (TN, 1, Kp)   class scores (written only on the last C step)
    acc_ref: (TN, Kp) f32  running scores accumulator over C chunks
    """
    c_step = pl.program_id(1)

    @pl.when(c_step == 0)
    def _init():
        acc_ref[...] = jnp.zeros_like(acc_ref)

    n_full = s_total // 128
    rem = s_total - n_full * 128

    if 0 < n_full <= max_unrolled_chunks:
        # Lane-partial accumulation: pure VALU adds over aligned 128-lane
        # chunks, then exactly one cross-lane (XLU) reduce per block.
        part = x_ref[:, :, 0:128].astype(jnp.float32)
        for k in range(1, n_full):
            off = k * 128
            part = part + x_ref[:, :, off:off + 128].astype(jnp.float32)
        pooled = jnp.sum(part, axis=-1, dtype=jnp.float32)            # (TN, TC)
        if rem:
            tail = x_ref[:, :, n_full * 128:s_total].astype(jnp.float32)
            pooled = pooled + jnp.sum(tail, axis=-1, dtype=jnp.float32)
    else:
        # Very large S (rare): bound trace size with a direct reduce.
        pooled = jnp.sum(x_ref[...].astype(jnp.float32), axis=-1,
                         dtype=jnp.float32)

    # Accumulate this C-chunk's contribution to the class scores on the MXU.
    acc_ref[...] += jnp.dot(pooled, w_ref[...].astype(jnp.float32),
                            preferred_element_type=jnp.float32)       # (TN, Kp)

    @pl.when(c_step == pl.num_programs(1) - 1)
    def _finalize():
        # TODO(synk): nn.Dropout(p=0.5) is identity at inference; training-mode
        # dropout is not modeled.
        scores = acc_ref[...] * jnp.float32(inv_s) + b_ref[...].astype(jnp.float32)
        o_ref[...] = scores[:, None, :].astype(o_ref.dtype)


def _round_up(v, m):
    return ((v + m - 1) // m) * m


def i3d_head_forward(x_ncthw, weight_kc, bias_k, *, x_block_bytes=4 << 20):
    """x_ncthw: (N, C, T, H, W); weight_kc: (K, C) torch-style; bias_k: (K,)."""
    N, C, T, H, W = x_ncthw.shape
    K = weight_kc.shape[0]
    S = T * H * W
    Kp = _round_up(K, 128)
    out_dtype = x_ncthw.dtype

    x_item = jnp.dtype(x_ncthw.dtype).itemsize
    w_item = jnp.dtype(weight_kc.dtype).itemsize
    o_item = jnp.dtype(out_dtype).itemsize

    # ---- Glue (plain JAX; no HBM-doubling transpose of the activations) ----
    x_ncs = x_ncthw.reshape(N, C, S)            # contiguous reshape, free
    w_ck = jnp.transpose(weight_kc, (1, 0))     # (C, K), tiny
    if Kp != K:                                 # lane-dense K (free plumbing)
        w_ck = jnp.pad(w_ck, ((0, 0), (0, Kp - K)))
        bias_k = jnp.pad(bias_k, (0, Kp - K))
    b_1k = bias_k.reshape(1, Kp)

    # ---- Batch tile: force nb >= 2 so the "parallel" axis spans both
    # TensorCores on v7x (v5e/v6e have a single TC and are unaffected). ----
    tn = max(1, N // 2) if N >= 2 else 1
    # TODO(synk): for N == 1 a megacore split of the C axis with per-core
    # partial score accumulators would use both v7x cores; not implemented.

    # ---- Channel tile: largest 8-aligned divisor of C (or full C) so the
    # x block stays near x_block_bytes; shrink tn first if needed. ----
    row_bytes = S * x_item                      # contiguous DMA run per row

    def pick_tc(max_rows):
        if max_rows >= C:
            return C
        d = min((max_rows // 8) * 8, (C // 8) * 8)
        while d >= 8:
            if C % d == 0:
                return d
            d -= 8
        return C  # no aligned divisor of C: take the full C axis
        # TODO(synk): pathological (C not 8-aligned AND C*S huge) would need a
        # padded-C path; all realistic I3D head shapes avoid it.

    while True:
        max_rows = max(x_block_bytes // max(tn * row_bytes, 1), 1)
        tc = pick_tc(max_rows)
        if tn == 1 or tn * tc * row_bytes <= 2 * x_block_bytes:
            break
        tn = max(1, tn // 2)
    while N % tn:                               # keep batch blocks exact
        tn -= 1

    nb = N // tn
    cb = C // tc

    # ---- VMEM footprint (x + weight double buffers, bias, out, scratch) ----
    footprint = (2 * tn * tc * S * x_item        # x double buffer
                 + 2 * tc * Kp * w_item          # weight double buffer
                 + 2 * Kp * jnp.dtype(b_1k.dtype).itemsize
                 + 2 * tn * Kp * o_item          # output double buffer
                 + tn * Kp * 4)                  # f32 scores accumulator
    vmem_limit = max(int(footprint * 3 // 2) + (4 << 20), 16 << 20)

    kernel = functools.partial(_i3d_head_kernel, s_total=S, inv_s=1.0 / S)

    cost = pl.CostEstimate(
        flops=N * C * S + 2 * N * C * Kp + N * Kp,
        transcendentals=0,
        bytes_accessed=(N * C * S * x_item + nb * C * Kp * w_item
                        + Kp * 4 + N * Kp * o_item),
    )

    out3 = pl.pallas_call(
        kernel,
        out_shape=jax.ShapeDtypeStruct((N, 1, Kp), out_dtype),
        grid_spec=pltpu.PrefetchScalarGridSpec(
            num_scalar_prefetch=0,
            grid=(nb, cb),
            in_specs=[
                pl.BlockSpec((tn, tc, S), lambda n, c: (n, c, 0)),
                pl.BlockSpec((tc, Kp), lambda n, c: (c, 0)),
                pl.BlockSpec((1, Kp), lambda n, c: (0, 0)),
            ],
            out_specs=pl.BlockSpec((tn, 1, Kp), lambda n, c: (n, 0, 0)),
            scratch_shapes=[pltpu.VMEM((tn, Kp), jnp.float32)],
        ),
        compiler_params=pltpu.CompilerParams(
            dimension_semantics=("parallel", "arbitrary"),
            vmem_limit_bytes=vmem_limit),
        cost_estimate=cost,
    )(x_ncs, w_ck, b_1k)

    return out3.reshape(N, Kp)[:, :K]


if __name__ == "__main__":
    # Small shapes consistent with the module: batch=2, in_channels=32,
    # temporal=5, spatial=8x8, num_classes=16.  S = 320 exercises the
    # 128-chunk + tail path; the second call forces multiple C blocks.
    N, C, T, H, W = 2, 32, 5, 8, 8
    num_classes = 16
    init_std = 0.01

    key = jax.random.PRNGKey(0)
    kx, kw = jax.random.split(key)

    x = jax.random.normal(kx, (N, C, T, H, W), dtype=jnp.float32)

    # Deterministic parameter init matching normal_init(fc_cls, std=0.01, bias=0):
    fc_weight = init_std * jax.random.normal(kw, (num_classes, C), dtype=jnp.float32)
    fc_bias = jnp.zeros((num_classes,), dtype=jnp.float32)

    # Pure-JAX reference.
    ref = jnp.mean(x, axis=(2, 3, 4)) @ fc_weight.T + fc_bias

    # Default tiling (single C block at these shapes).
    out_auto = jax.block_until_ready(i3d_head_forward(x, fc_weight, fc_bias))
    # Tiny x-block budget to force tc < C and exercise the C-accumulation path.
    out_cblk = jax.block_until_ready(
        i3d_head_forward(x, fc_weight, fc_bias, x_block_bytes=20 << 10))

    assert out_auto.shape == (N, num_classes)
    assert out_cblk.shape == (N, num_classes)
    assert jnp.allclose(out_auto, ref, atol=2e-5, rtol=1e-5)
    assert jnp.allclose(out_cblk, ref, atol=2e-5, rtol=1e-5)

    print("KERNEL_OK")
</pallas_src>

<mosaic_0001>
module attributes {stable_mosaic.version = 11 : i64} {
  func.func @_i3d_head_kernel(%arg0: i32, %arg1: i32, %arg2: memref<1x32x320xf32, #tpu.memory_space<vmem>>, %arg3: memref<32x128xf32, #tpu.memory_space<vmem>>, %arg4: memref<1x128xf32, #tpu.memory_space<vmem>>, %arg5: memref<1x1x128xf32, #tpu.memory_space<vmem>>, %arg6: memref<1x128xf32, #tpu.memory_space<vmem>>) attributes {dimension_semantics = [#tpu.dimension_semantics<parallel>, #tpu.dimension_semantics<arbitrary>], iteration_bounds = array<i64: 2, 1>, scalar_prefetch = 0 : i64, scratch_operands = 1 : i64, tpu.core_type = #tpu.core_type<tc>, window_params = [{transform_indices = @transform_0, window_bounds = array<i64: 1, 32, 320>}, {transform_indices = @transform_1, window_bounds = array<i64: 32, 128>}, {pipeline_mode = #tpu.pipeline_mode<synchronous>, transform_indices = @transform_2, window_bounds = array<i64: 1, 128>}, {transform_indices = @transform_3, window_bounds = array<i64: 1, 1, 128>}]} {
    %c0_i32 = arith.constant 0 : i32
    %0 = arith.cmpi eq, %arg1, %c0_i32 : i32
    %1 = arith.extui %0 : i1 to i32
    %c0_i32_0 = arith.constant 0 : i32
    %2 = arith.cmpi ne, %1, %c0_i32_0 : i32
    scf.if %2 {
      %cst_17 = arith.constant 0.000000e+00 : f32
      %18 = vector.broadcast %cst_17 : f32 to vector<1x128xf32>
      %c0_18 = arith.constant 0 : index
      %c0_19 = arith.constant 0 : index
      %19 = vector.load %arg6[%c0_18, %c0_19] : memref<1x128xf32, #tpu.memory_space<vmem>>, vector<1x128xf32>
      tpu.vector_store %arg6[%c0_18, %c0_19], %18 {strides = array<i32>} : memref<1x128xf32, #tpu.memory_space<vmem>>, vector<1x128xf32>,
    } else {
    }
    %c0 = arith.constant 0 : index
    %c0_1 = arith.constant 0 : index
    %c0_2 = arith.constant 0 : index
    %3 = vector.load %arg2[%c0, %c0_1, %c0_2] : memref<1x32x320xf32, #tpu.memory_space<vmem>>, vector<1x32x128xf32>
    %c0_3 = arith.constant 0 : index
    %c0_4 = arith.constant 0 : index
    %c128 = arith.constant 128 : index
    %4 = vector.load %arg2[%c0_3, %c0_4, %c128] : memref<1x32x320xf32, #tpu.memory_space<vmem>>, vector<1x32x128xf32>
    %5 = arith.addf %3, %4 : vector<1x32x128xf32>
    %cst = arith.constant dense<0.000000e+00> : vector<1x32xf32>
    %6 = vector.multi_reduction <add>, %5, %cst [2] : vector<1x32x128xf32> to vector<1x32xf32>
    %c0_5 = arith.constant 0 : index
    %c0_6 = arith.constant 0 : index
    %c256 = arith.constant 256 : index
    %7 = vector.load %arg2[%c0_5, %c0_6, %c256] : memref<1x32x320xf32, #tpu.memory_space<vmem>>, vector<1x32x64xf32>
    %cst_7 = arith.constant dense<0.000000e+00> : vector<1x32xf32>
    %8 = vector.multi_reduction <add>, %7, %cst_7 [2] : vector<1x32x64xf32> to vector<1x32xf32>
    %9 = arith.addf %6, %8 : vector<1x32xf32>
    %c0_8 = arith.constant 0 : index
    %c0_9 = arith.constant 0 : index
    %10 = vector.load %arg6[%c0_8, %c0_9] : memref<1x128xf32, #tpu.memory_space<vmem>>, vector<1x128xf32>
    %c0_10 = arith.constant 0 : index
    %c0_11 = arith.constant 0 : index
    %11 = vector.load %arg3[%c0_10, %c0_11] : memref<32x128xf32, #tpu.memory_space<vmem>>, vector<32x128xf32>
    %cst_12 = arith.constant dense<0.000000e+00> : vector<1x128xf32>
    %12 = tpu.matmul %9, %11, %cst_12 {dimension_numbers = #tpu.dot_dimension_numbers<[1], [0], [0], [1], [0, 0, 1, 1], [], []>} : vector<1x32xf32>, vector<32x128xf32>, vector<1x128xf32> -> vector<1x128xf32>
    %13 = arith.addf %10, %12 : vector<1x128xf32>
    %c0_13 = arith.constant 0 : index
    %c0_14 = arith.constant 0 : index
    %14 = vector.load %arg6[%c0_13, %c0_14] : memref<1x128xf32, #tpu.memory_space<vmem>>, vector<1x128xf32>
    tpu.vector_store %arg6[%c0_13, %c0_14], %13 {strides = array<i32>} : memref<1x128xf32, #tpu.memory_space<vmem>>, vector<1x128xf32>,
    %c0_i32_15 = arith.constant 0 : i32
    %15 = arith.cmpi eq, %arg1, %c0_i32_15 : i32
    %16 = arith.extui %15 : i1 to i32
    %c0_i32_16 = arith.constant 0 : i32
    %17 = arith.cmpi ne, %16, %c0_i32_16 : i32
    scf.if %17 {
      %c0_17 = arith.constant 0 : index
      %c0_18 = arith.constant 0 : index
      %18 = vector.load %arg6[%c0_17, %c0_18] : memref<1x128xf32, #tpu.memory_space<vmem>>, vector<1x128xf32>
      %cst_19 = arith.constant 3.125000e-03 : f32
      %19 = vector.broadcast %cst_19 : f32 to vector<1x128xf32>
      %20 = arith.mulf %18, %19 : vector<1x128xf32>
      %c0_20 = arith.constant 0 : index
      %c0_21 = arith.constant 0 : index
      %21 = vector.load %arg4[%c0_20, %c0_21] : memref<1x128xf32, #tpu.memory_space<vmem>>, vector<1x128xf32>
      %22 = arith.addf %20, %21 : vector<1x128xf32>
      %23 = vector.shape_cast %22 : vector<1x128xf32> to vector<1x1x128xf32>
      %c0_22 = arith.constant 0 : index
      %c0_23 = arith.constant 0 : index
      %c0_24 = arith.constant 0 : index
      %24 = vector.load %arg5[%c0_22, %c0_23, %c0_24] : memref<1x1x128xf32, #tpu.memory_space<vmem>>, vector<1x1x128xf32>
      tpu.vector_store %arg5[%c0_22, %c0_23, %c0_24], %23 {strides = array<i32>} : memref<1x1x128xf32, #tpu.memory_space<vmem>>, vector<1x1x128xf32>,
    } else {
    }
    return
  }
  func.func @transform_0(%arg0: i32, %arg1: i32) -> (i32, i32, i32) {
    %c0_i32 = arith.constant 0 : i32
    %c0_i32_0 = arith.constant 0 : i32
    return %arg0, %arg1, %c0_i32 : i32, i32, i32
  }
  func.func @transform_1(%arg0: i32, %arg1: i32) -> (i32, i32) {
    %c0_i32 = arith.constant 0 : i32
    %c0_i32_0 = arith.constant 0 : i32
    return %arg1, %c0_i32 : i32, i32
  }
  func.func @transform_2(%arg0: i32, %arg1: i32) -> (i32, i32) {
    %c0_i32 = arith.constant 0 : i32
    %c0_i32_0 = arith.constant 0 : i32
    %c0_i32_1 = arith.constant 0 : i32
    return %c0_i32, %c0_i32_0 : i32, i32
  }
  func.func @transform_3(%arg0: i32, %arg1: i32) -> (i32, i32, i32) {
    %c0_i32 = arith.constant 0 : i32
    %c0_i32_0 = arith.constant 0 : i32
    %c0_i32_1 = arith.constant 0 : i32
    return %arg0, %c0_i32, %c0_i32_0 : i32, i32, i32
  }
}

</mosaic_0001>

<llo_original>
// kernel: tpu_custom_call.1
$region0: #{tpu_custom_call.1}
  #allocation0 [shape = 'u32[]', space=smem, size = 0x4, offset = 0x4, fixed_abs, tag = 'smem constant byte address 0x4 - core index']
  #allocation1 [shape = 'u32[144,128]{1,0:T(1,128)}', space=vmem, size = 0x12000, scoped, tag = 'internal scratch']
  #allocation2 [shape = 'f32[1,128]{1,0:T(1,128)}', space=vmem, size = 0x200, scoped, tag = 'scratch operand']
  %s0 = inlined_call_operand.hbm [shape: f32[2,32,320], index: 0, kind: input, shape index: {}]
  %s1 = inlined_call_operand.hbm [shape: f32[32,128], index: 1, kind: input, shape index: {}]
  %s2 = inlined_call_operand.vmem [shape: f32[1,128], index: 2, kind: input, shape index: {}]
  %s3 = inlined_call_operand.hbm [shape: f32[2,1,128], index: 3, kind: output, shape index: {}]
  %s4 = sld [smem:[#allocation0]]
  $region61: #{tpu_custom_call.1} parent=0
    _
  %s6 = ssub.s32 1, %s4
  %s7 = scalar_select 0, %s6, %s4
  $region1: #{tpu_custom_call.1} parent=0
    #allocation3 [shape = 'u8[98304]{0}', space=vmem, size = 0x18000, scoped, tag = 'input window, operand 0']
    #allocation4 [shape = 's32[2]{0}', space=sflag, size = 0x8, scoped, tag = 'scoped memory for tpu_custom_call.1']
    #allocation5 [shape = 's32[2]{0}', space=sflag, size = 0x8, scoped, tag = 'scoped memory for tpu_custom_call.1']
    #allocation6 [shape = 'u8[16384]{0}', space=vmem, size = 0x4000, scoped, tag = 'input window, operand 1, single buffered']
    #allocation7 [shape = 's32[1]{0}', space=sflag, size = 0x4, scoped, tag = 'scoped memory for tpu_custom_call.1']
    #allocation8 [shape = 'u8[1024]{0}', space=vmem, size = 0x400, scoped, tag = 'output window, operand 0']
    %8 = vsyncpa [#allocation4], 0
    %s9 = scalar_lea.sflag [#allocation4], 1
    %10 = vsyncpa %s9, 0
    %11 = vsyncpa [#allocation7], 0
    %12 = vsyncpa [#allocation5], 0
    %s13 = scalar_lea.sflag [#allocation5], 1
    %14 = vsyncpa %s13, 0
    loop: start=0, step=1, limit=4
    $region2: #{tpu_custom_call.1} parent=1 // loop_pre_header
      _
    $region3: #{tpu_custom_call.1} parent=1 // loop_header
      %s16 = sphi 0, %s20
      %p17 = scmp.ge.s32.totalorder %s16, 4
      %s23 = sphi 0, %s35
      %s24 = sphi 0, %s31
      %s25 = sphi 0, %s23
      %s26 = sphi 0, %s24
      %s27 = sphi 0, %s25
      %s28 = sphi 0, %s26
      %s40 = sphi 0, %s42
      %s43 = sphi 0, %s40
      %s44 = sphi 0, %s43
      %s60 = sphi 0, %s44
      %s66 = sphi 0, %s68
      %s69 = sphi 0, %s66
      %s70 = sphi 0, %s69
      %s86 = sphi 0, %s70
      %s90 = sphi 0, %s90
      %s92 = sphi 0, %s90
      %s93 = sphi 0, %s92
      %s107 = sphi 0, %s93
      %s113 = sphi 0, %s115
      %s116 = sphi 0, %s113
      %s117 = sphi 0, %s116
      %s133 = sphi 0, %s117
    $region4: #{tpu_custom_call.1} parent=1 // loop_header_branch
      %19 = sbr.rel (%p17) target = $region8
    $region5: #{tpu_custom_call.1} parent=1 // loop_body
      %s21 = ssub.s32 %s16, 1
      %s22 = ssub.s32 %s16, 2
      %s29 = sadd.s32 1, %s24
      %p30 = scmp.ge.s32.totalorder %s29, 1
      %s31 = scalar_select %p30, 0, %s29
      %s32 = sadd.s32 1, %s23
      %s33 = scalar_select %p30, %s32, %s23
      %p34 = scmp.ge.s32.totalorder %s33, 2
      %s35 = scalar_select %p34, 0, %s33
      %s36 = ssub.s32 %s23, %s35
      %s37 = ssub.s32 %s24, %s31
      %s38 = sor.u32 %s36, %s37
      %p39 = scmp.eq.s32.totalorder %s38, 0
      %s41 = sadd.s32 %s40, 1
      %s42 = scalar_select %p39, %s40, %s41
      %p45 = pneg %p39
      %p46 = scmp.eq.s32.totalorder %s16, 1
      %p47 = por %p45, %p46
      %p48 = scmp.ne.s32.totalorder %s40, %s43
      %p49 = scmp.eq.s32.totalorder %s16, 0
      %p50 = por %p48, %p49
      %p51 = scmp.ne.s32.totalorder %s40, %s43
      %p52 = scmp.eq.s32.totalorder %s21, 1
      %p53 = por %p51, %p52
      %p54 = scmp.ne.s32.totalorder %s43, %s44
      %p55 = scmp.eq.s32.totalorder %s21, 0
      %p56 = por %p54, %p55
      %p57 = scmp.ne.s32.totalorder %s43, %s44
      %p58 = scmp.eq.s32.totalorder %s22, 1
      %p59 = por %p57, %p58
      %p61 = scmp.ne.s32.totalorder %s44, %s60
      %p62 = scmp.eq.s32.totalorder %s22, 0
      %p63 = por %p61, %p62
      %s64 = ssub.s32 %s24, %s31
      %p65 = scmp.eq.s32.totalorder %s64, 0
      %s67 = sadd.s32 %s66, 1
      %s68 = scalar_select %p65, %s66, %s67
      %p71 = pneg %p65
      %p72 = scmp.eq.s32.totalorder %s16, 1
      %p73 = por %p71, %p72
      %p74 = scmp.ne.s32.totalorder %s66, %s69
      %p75 = scmp.eq.s32.totalorder %s16, 0
      %p76 = por %p74, %p75
      %p77 = scmp.ne.s32.totalorder %s66, %s69
      %p78 = scmp.eq.s32.totalorder %s21, 1
      %p79 = por %p77, %p78
      %p80 = scmp.ne.s32.totalorder %s69, %s70
      %p81 = scmp.eq.s32.totalorder %s21, 0
      %p82 = por %p80, %p81
      %p83 = scmp.ne.s32.totalorder %s69, %s70
      %p84 = scmp.eq.s32.totalorder %s22, 1
      %p85 = por %p83, %p84
      %p87 = scmp.ne.s32.totalorder %s70, %s86
      %p88 = scmp.eq.s32.totalorder %s22, 0
      %p89 = por %p87, %p88
      %s91 = sadd.s32 %s90, 1
      %p94 = scmp.eq.s32.totalorder %s16, 1
      %p95 = scmp.ne.s32.totalorder %s90, %s92
      %p96 = scmp.eq.s32.totalorder %s16, 0
      %p97 = por %p95, %p96
      %p98 = scmp.ne.s32.totalorder %s90, %s92
      %p99 = scmp.eq.s32.totalorder %s21, 1
      %p100 = por %p98, %p99
      %p101 = scmp.ne.s32.totalorder %s92, %s93
      %p102 = scmp.eq.s32.totalorder %s21, 0
      %p103 = por %p101, %p102
      %p104 = scmp.ne.s32.totalorder %s92, %s93
      %p105 = scmp.eq.s32.totalorder %s22, 1
      %p106 = por %p104, %p105
      %p108 = scmp.ne.s32.totalorder %s93, %s107
      %p109 = scmp.eq.s32.totalorder %s22, 0
      %p110 = por %p108, %p109
      %s111 = ssub.s32 %s23, %s35
      %p112 = scmp.eq.s32.totalorder %s111, 0
      %s114 = sadd.s32 %s113, 1
      %s115 = scalar_select %p112, %s113, %s114
      %p118 = pneg %p112
      %p119 = scmp.eq.s32.totalorder %s16, 1
      %p120 = por %p118, %p119
      %p121 = scmp.ne.s32.totalorder %s113, %s116
      %p122 = scmp.eq.s32.totalorder %s16, 0
      %p123 = por %p121, %p122
      %p124 = scmp.ne.s32.totalorder %s113, %s116
      %p125 = scmp.eq.s32.totalorder %s21, 1
      %p126 = por %p124, %p125
      %p127 = scmp.ne.s32.totalorder %s116, %s117
      %p128 = scmp.eq.s32.totalorder %s21, 0
      %p129 = por %p127, %p128
      %p130 = scmp.ne.s32.totalorder %s116, %s117
      %p131 = scmp.eq.s32.totalorder %s22, 1
      %p132 = por %p130, %p131
      %p134 = scmp.ne.s32.totalorder %s117, %s133
      %p135 = scmp.eq.s32.totalorder %s22, 0
      %p136 = por %p134, %p135
      %p137 = scmp.le.s32.totalorder 1, %s16
      %p138 = scmp.lt.s32.totalorder %s16, 3
      %p139 = pnand %p137, %p138
      %p140 = pneg %p139
      // Predicated region
      $region9: #{tpu_custom_call.1} parent=5 // pred_check
        _
      $region10: #{tpu_custom_call.1} parent=5 // pred_check_branch
        %142 = sbr.rel (%p139) target = $region12
      $region11: #{tpu_custom_call.1} parent=5 // pred_region
        %s143 = ssub.s32 %s16, 1
        // Predicated region
        $region13: #{tpu_custom_call.1} parent=11 // pred_check
          %p144 = pneg %p82
        $region14: #{tpu_custom_call.1} parent=11 // pred_check_branch
          %146 = sbr.rel (%p144) target = $region16
        $region15: #{tpu_custom_call.1} parent=11 // pred_region
          %s147 = smul.u32 4, %s26
          %s149 = ssub.s32 512, 512
          %150 = vsyncadd [#allocation7], %s149
          %s151 = smul.addr %s147, 128
          %s152 = scalar_lea.hbm %s1, %s151
          %s153 = sshll.u32 [#allocation6], 4
          %s154 = int_to_ptr.vmem [resolvable:$true] %s153
          %159 = dma.hbm_to_vmem [thread:$0]  %s152, 512, %s154, [#allocation7], 128, 128, 8
        $region16: #{tpu_custom_call.1} parent=11 // pred_fallthru
          _
        // Predicated region
        $region17: #{tpu_custom_call.1} parent=11 // pred_check
          %p160 = pneg %p103
        $region18: #{tpu_custom_call.1} parent=11 // pred_check_branch
          %162 = sbr.rel (%p160) target = $region20
        $region19: #{tpu_custom_call.1} parent=11 // pred_region
          _
        $region20: #{tpu_custom_call.1} parent=11 // pred_fallthru
          _
      $region12: #{tpu_custom_call.1} parent=5 // pred_fallthru
        _
      %p163 = scmp.lt.s32.totalorder %s16, 2
      // Predicated region
      $region21: #{tpu_custom_call.1} parent=5 // pred_check
        %p164 = pneg %p163
      $region22: #{tpu_custom_call.1} parent=5 // pred_check_branch
        %166 = sbr.rel (%p164) target = $region24
      $region23: #{tpu_custom_call.1} parent=5 // pred_region
        // Predicated region
        $region25: #{tpu_custom_call.1} parent=23 // pred_check
          %p167 = pneg %p50
        $region26: #{tpu_custom_call.1} parent=23 // pred_check_branch
          %169 = sbr.rel (%p167) target = $region28
        $region27: #{tpu_custom_call.1} parent=23 // pred_region
          %s170 = sand.u32 %s40, 1
          %s171 = scalar_lea.sflag [#allocation4], %s170
          %s172 = sand.u32 %s40, 1
          %s173 = smul.addr %s172, 96
          %s174 = scalar_lea.vmem [#allocation3], %s173
          %s175 = smul.u32 4, %s24
          %s177 = ssub.s32 1536, 1536
          %178 = vsyncadd %s171, %s177
          %s179 = smul.addr %s175, 3
          %s180 = smul.addr %s23, 12
          %s181 = sadd.s32 %s179, %s180
          %s182 = smul.addr %s181, 128
          %s183 = scalar_lea.hbm %s0, %s182
          %s184 = sshll.u32 %s174, 4
          %s185 = int_to_ptr.vmem [resolvable:$true] %s184
          %190 = dma.hbm_to_vmem [thread:$0]  %s183, 1536, %s185, %s171, 384, 384, 24
        $region28: #{tpu_custom_call.1} parent=23 // pred_fallthru
          _
      $region24: #{tpu_custom_call.1} parent=5 // pred_fallthru
        _
      %p191 = scmp.le.s32.totalorder 1, %s16
      %p192 = scmp.lt.s32.totalorder %s16, 3
      %p193 = pnand %p191, %p192
      %p194 = pneg %p193
      // Predicated region
      $region29: #{tpu_custom_call.1} parent=5 // pred_check
        _
      $region30: #{tpu_custom_call.1} parent=5 // pred_check_branch
        %196 = sbr.rel (%p193) target = $region32
      $region31: #{tpu_custom_call.1} parent=5 // pred_region
        %s197 = ssub.s32 %s16, 1
        %s198 = sand.u32 %s43, 1
        %s199 = scalar_lea.sflag [#allocation4], %s198
        %s200 = sand.u32 %s43, 1
        %s201 = smul.addr %s200, 96
        %s202 = scalar_lea.vmem [#allocation3], %s201
        // Predicated region
        $region33: #{tpu_custom_call.1} parent=31 // pred_check
          %p203 = pneg %p56
        $region34: #{tpu_custom_call.1} parent=31 // pred_check_branch
          %205 = sbr.rel (%p203) target = $region36
        $region35: #{tpu_custom_call.1} parent=31 // pred_region
          %206 = dma.done %s199, 1536
        $region36: #{tpu_custom_call.1} parent=31 // pred_fallthru
          _
        // Predicated region
        $region37: #{tpu_custom_call.1} parent=31 // pred_check
          %p207 = pneg %p82
        $region38: #{tpu_custom_call.1} parent=31 // pred_check_branch
          %209 = sbr.rel (%p207) target = $region40
        $region39: #{tpu_custom_call.1} parent=31 // pred_region
          %210 = dma.done [#allocation7], 512
        $region40: #{tpu_custom_call.1} parent=31 // pred_fallthru
          _
        %s211 = sand.u32 %s43, 1
        %s212 = scalar_lea.sflag [#allocation4], %s211
        %s213 = sand.u32 %s43, 1
        %s214 = smul.addr %s213, 96
        %s215 = scalar_lea.vmem [#allocation3], %s214
        %p216 = pneg %p56
        %p217 = pneg %p53
        %p218 = pneg %p82
        %p219 = pneg %p79
        %p220 = pneg %p103
        %p221 = pneg %p100
        %p222 = pneg %p129
        %p223 = pneg %p126
        %s224 = sand.u32 %s116, 1
        %s225 = scalar_lea.sflag [#allocation5], %s224
        %s226 = sand.u32 %s116, 1
        %s227 = scalar_lea.vmem [#allocation8], %s226
        %s228 = smul.u32 4, %s26
        %s229 = smul.u32 4, %s26
        %p230 = scmp.eq.s32.totalorder %s26, 0
        // Predicated region
        $region41: #{tpu_custom_call.1} parent=31 // pred_check
          %p231 = pneg %p230
        $region42: #{tpu_custom_call.1} parent=31 // pred_check_branch
          %233 = sbr.rel (%p231) target = $region44
        $region43: #{tpu_custom_call.1} parent=31 // pred_region
          %234 = vst [vmem:[#allocation2] sm:$0x1] 0.0
        $region44: #{tpu_custom_call.1} parent=31 // pred_fallthru
          _
        %v235 = vld [vmem:[%s202] sm:$0xff]
        %v236 = vld [vmem:[%s202 + $0x18] sm:$0xff]
        %v237 = vld [vmem:[%s202 + $0x30] sm:$0xff]
        %v238 = vld [vmem:[%s202 + $0x48] sm:$0xff]
        %v239 = vld [vmem:[%s202 + $0x8] sm:$0xff]
        %v240 = vld [vmem:[%s202 + $0x20] sm:$0xff]
        %v241 = vld [vmem:[%s202 + $0x38] sm:$0xff]
        %v242 = vld [vmem:[%s202 + $0x50] sm:$0xff]
        %v243 = vadd.f32 %v235, %v239
        %v244 = vadd.f32 %v236, %v240
        %v245 = vadd.f32 %v237, %v241
        %v246 = vadd.f32 %v238, %v242
        %247 = vadd.xlane.f32.xlu0 %v243
        %v248 = vpop.xlane.xlu0 %247
        %249 = vadd.xlane.f32.xlu0 %v244
        %v250 = vpop.xlane.xlu0 %249
        %251 = vadd.xlane.f32.xlu0 %v245
        %v252 = vpop.xlane.xlu0 %251
        %253 = vadd.xlane.f32.xlu0 %v246
        %v254 = vpop.xlane.xlu0 %253
        %v255 = vld [vmem:[%s202 + $0x10] sm:$0xff]
        %v256 = vld [vmem:[%s202 + $0x28] sm:$0xff]
        %v257 = vld [vmem:[%s202 + $0x40] sm:$0xff]
        %v258 = vld [vmem:[%s202 + $0x58] sm:$0xff]
        %vm259 = vcmask 523264
        %v260 = vsel %vm259, %v255, 0.0
        %261 = vadd.xlane.f32.xlu0 %v260
        %v262 = vpop.xlane.xlu0 %261
        %v263 = vsel %vm259, %v256, 0.0
        %264 = vadd.xlane.f32.xlu0 %v263
        %v265 = vpop.xlane.xlu0 %264
        %v266 = vsel %vm259, %v257, 0.0
        %267 = vadd.xlane.f32.xlu0 %v266
        %v268 = vpop.xlane.xlu0 %267
        %v269 = vsel %vm259, %v258, 0.0
        %270 = vadd.xlane.f32.xlu0 %v269
        %v271 = vpop.xlane.xlu0 %270
        %v272 = vadd.f32 %v248, %v262
        %v273 = vadd.f32 %v250, %v265
        %v274 = vadd.f32 %v252, %v268
        %v275 = vadd.f32 %v254, %v271
        %v276 = vld [vmem:[#allocation2] sm:$0x1]
        %v277 = vld [vmem:[#allocation6] sm:$0xff]
        %v278 = vld [vmem:[#allocation6 + $0x8] sm:$0xff]
        %v279 = vld [vmem:[#allocation6 + $0x10] sm:$0xff]
        %v280 = vld [vmem:[#allocation6 + $0x18] sm:$0xff]
        %v285 = vlaneseq
        %v286 = vand.u32 %v285, 127
        %v287 = vlaneseq
        %v288 = vshrl.u32 %v287, 7
        %v289 = vsub.s32 %v286, %v288
        %v290 = vrot.slane %v272, %v289
        %v291 = vadd.s32 %v286, 4294967288
        %v292 = vlaneseq
        %v293 = vshrl.u32 %v292, 7
        %v294 = vsub.s32 %v291, %v293
        %v295 = vrot.slane %v273, %v294
        %vm296 = vcmask 130112
        %v297 = vsel %vm296, %v295, %v290
        %v298 = vadd.s32 %v286, 4294967280
        %v299 = vlaneseq
        %v300 = vshrl.u32 %v299, 7
        %v301 = vsub.s32 %v298, %v300
        %v302 = vrot.slane %v274, %v301
        %vm303 = vcmask 195712
        %v304 = vsel %vm303, %v302, %v297
        %v305 = vadd.s32 %v286, 4294967272
        %v306 = vlaneseq
        %v307 = vshrl.u32 %v306, 7
        %v308 = vsub.s32 %v305, %v307
        %v309 = vrot.slane %v275, %v308
        %vm310 = vcmask 261312
        %v311 = vsel %vm310, %v309, %v304
        %vm312 = vcmask 261120
        %v313 = vsel %vm312, %v311, 0
        %315 = vmatprep.subr.mxu0 0.0
        %316 = vmatpush1.msra.mxu0 0.0
        %317 = vmatprep.subr.mxu0 0.0
        %318 = vmatpush1.msra.mxu0 0.0
        %319 = vmatprep.subr.mxu0 0.0
        %320 = vmatpush1.msra.mxu0 0.0
        %321 = vmatprep.subr.mxu0 0.0
        %322 = vmatpush1.msra.mxu0 0.0
        %323 = vmatprep.subr.mxu0 0.0
        %324 = vmatpush1.msra.mxu0 0.0
        %325 = vmatprep.subr.mxu0 0.0
        %326 = vmatpush1.msra.mxu0 0.0
        %327 = vmatprep.subr.mxu0 0.0
        %328 = vmatpush1.msra.mxu0 0.0
        %329 = vmatprep.subr.mxu0 0.0
        %330 = vmatpush1.msra.mxu0 0.0
        %331 = vmatprep.subr.mxu0 0.0
        %332 = vmatpush1.msra.mxu0 0.0
        %333 = vmatprep.subr.mxu0 0.0
        %334 = vmatpush1.msra.mxu0 0.0
        %335 = vmatprep.subr.mxu0 0.0
        %336 = vmatpush1.msra.mxu0 0.0
        %337 = vmatprep.subr.mxu0 0.0
        %338 = vmatpush1.msra.mxu0 0.0
        %339 = vmatprep.subr.mxu0 0.0
        %340 = vmatpush1.msra.mxu0 %v280
        %341 = vmatprep.subr.mxu0 0.0
        %342 = vmatpush1.msra.mxu0 %v279
        %343 = vmatprep.subr.mxu0 0.0
        %344 = vmatpush1.msra.mxu0 %v278
        %345 = vmatprep.subr.mxu0 0.0
        %346 = vmatpush1.msra.mxu0 %v277
        %347 = vmatprep.subr.mxu0 0.0
        %348 = vmatpush2.msra.mxu0 0.0
        %349 = vmatprep.subr.mxu0 0.0
        %350 = vmatpush2.msra.mxu0 0.0
        %351 = vmatprep.subr.mxu0 0.0
        %352 = vmatpush2.msra.mxu0 0.0
        %353 = vmatprep.subr.mxu0 0.0
        %354 = vmatpush2.msra.mxu0 0.0
        %355 = vmatprep.subr.mxu0 0.0
        %356 = vmatpush2.msra.mxu0 0.0
        %357 = vmatprep.subr.mxu0 0.0
        %358 = vmatpush2.msra.mxu0 0.0
        %359 = vmatprep.subr.mxu0 0.0
        %360 = vmatpush2.msra.mxu0 0.0
        %361 = vmatprep.subr.mxu0 0.0
        %362 = vmatpush2.msra.mxu0 0.0
        %363 = vmatprep.subr.mxu0 0.0
        %364 = vmatpush2.msra.mxu0 0.0
        %365 = vmatprep.subr.mxu0 0.0
        %366 = vmatpush2.msra.mxu0 0.0
        %367 = vmatprep.subr.mxu0 0.0
        %368 = vmatpush2.msra.mxu0 0.0
        %369 = vmatprep.subr.mxu0 0.0
        %370 = vmatpush2.msra.mxu0 0.0
        %371 = vmatprep.subr.mxu0 0.0
        %372 = vmatpush2.msra.mxu0 0.0
        %373 = vmatprep.subr.mxu0 0.0
        %374 = vmatpush2.msra.mxu0 0.0
        %375 = vmatprep.subr.mxu0 0.0
        %376 = vmatpush2.msra.mxu0 0.0
        %377 = vmatprep.subr.mxu0 0.0
        %378 = vmatpush2.msra.mxu0 0.0
        %379 = vmatprep.mubr.f32.mxu0 0.0
        %380 = vmatmul.mubr.f32.gmra.mxu0 %v313
        %v381 = vpop.f32.mrf.mxu0
        %v382 = vadd.f32 0.0, %v381
        %v383 = vpop.f32.mrf.mxu0
        %384 = vdwg.mxu0
        %v385 = vadd.f32 %v276, %v382
        %386 = vst [vmem:[#allocation2] sm:$0x1] %v385
        // Predicated region
        $region45: #{tpu_custom_call.1} parent=31 // pred_check
          %p387 = pneg %p230
        $region46: #{tpu_custom_call.1} parent=31 // pred_check_branch
          %389 = sbr.rel (%p387) target = $region48
        $region47: #{tpu_custom_call.1} parent=31 // pred_region
          %v390 = vld [vmem:[#allocation2] sm:$0x1]
          %v391 = vmul.f32 %v390, 0.003125
          %v392 = vld [vmem:[%s2] sm:$0x1]
          %v393 = vadd.f32 %v391, %v392
          %394 = vst [vmem:[%s227] sm:$0x1] %v393
        $region48: #{tpu_custom_call.1} parent=31 // pred_fallthru
          _
        %s395 = sand.u32 %s116, 1
        %s396 = scalar_lea.sflag [#allocation5], %s395
        %s397 = sand.u32 %s116, 1
        %s398 = scalar_lea.vmem [#allocation8], %s397
        // Predicated region
        $region49: #{tpu_custom_call.1} parent=31 // pred_check
          %p399 = pneg %p126
        $region50: #{tpu_custom_call.1} parent=31 // pred_check_branch
          %401 = sbr.rel (%p399) target = $region52
        $region51: #{tpu_custom_call.1} parent=31 // pred_region
          %s403 = ssub.s32 16, 16
          %404 = vsyncadd %s396, %s403
          %s405 = smul.addr %s25, 16
          %s406 = scalar_lea.hbm %s3, %s405
          %s408 = sshll.u32 %s398, 4
          %s409 = int_to_ptr.vmem [resolvable:$true] %s408
          %411 = dma.vmem_to_hbm [thread:$0]  %s409, 16, %s406, %s396
        $region52: #{tpu_custom_call.1} parent=31 // pred_fallthru
          _
      $region32: #{tpu_custom_call.1} parent=5 // pred_fallthru
        _
      %p412 = scmp.le.s32.totalorder 2, %s16
      // Predicated region
      $region53: #{tpu_custom_call.1} parent=5 // pred_check
        %p413 = pneg %p412
      $region54: #{tpu_custom_call.1} parent=5 // pred_check_branch
        %415 = sbr.rel (%p413) target = $region56
      $region55: #{tpu_custom_call.1} parent=5 // pred_region
        %s416 = ssub.s32 %s16, 2
        // Predicated region
        $region57: #{tpu_custom_call.1} parent=55 // pred_check
          %p417 = pneg %p132
        $region58: #{tpu_custom_call.1} parent=55 // pred_check_branch
          %419 = sbr.rel (%p417) target = $region60
        $region59: #{tpu_custom_call.1} parent=55 // pred_region
          %s420 = sand.u32 %s117, 1
          %s421 = scalar_lea.sflag [#allocation5], %s420
          %s422 = sand.u32 %s117, 1
          %s423 = scalar_lea.vmem [#allocation8], %s422
          %424 = dma.done %s421, 16
        $region60: #{tpu_custom_call.1} parent=55 // pred_fallthru
          _
      $region56: #{tpu_custom_call.1} parent=5 // pred_fallthru
        _
    $region6: #{tpu_custom_call.1} parent=1 // loop_footer
      %s20 = sadd.s32 1, %s16
    $region7: #{tpu_custom_call.1} parent=1 // loop_footer_branch
      %15 = sbr.rel target = $region3
    $region8: #{tpu_custom_call.1} parent=1 // loop_exit
      _
    %425 = vsyncpa [#allocation4], 1
    %s426 = scalar_lea.sflag [#allocation4], 1
    %427 = vsyncpa %s426, 1
    %428 = vsyncpa [#allocation7], 1
    %429 = vsyncpa [#allocation5], 1
    %s430 = scalar_lea.sflag [#allocation5], 1
    %431 = vsyncpa %s430, 1

</llo_original>
